<compile_context>
chip_gen: v6e
topology: v6e:2x2x1
jax: 0.10.0
libtpu: 0.0.40
codegen_flags: <defaults>
</compile_context>

<pallas_src>
import jax
import jax.numpy as jnp
from jax.experimental import pallas as pl
from jax.experimental.pallas import tpu as pltpu

KERNEL_SIZE = 5  # matches BinaryMorphology default


def _make_morph_kernel(B, H, W, kernel_size, op_type):
    pad = kernel_size // 2
    Hp, Wp = H + 2 * pad, W + 2 * pad

    def kernel(x_ref, o_ref, s_ref):
        # x_ref: (B, H, W) native-dtype block; o_ref: (B, H, W) f32;
        # s_ref: (B, Hp, Wp) f32 zero-padded staging scratch.

        # Binarize on the native input dtype (no wrapper cast pass).
        x = x_ref[...]
        if op_type == "dilate":
            b = (x >= 0.5).astype(jnp.float32)
        else:  # erode
            b = (x < 0.5).astype(jnp.float32)

        # Zero only the halo; the interior is fully overwritten every step.
        zrow = jnp.zeros((B, pad, Wp), jnp.float32)
        s_ref[:, 0:pad, :] = zrow
        s_ref[:, H + pad:Hp, :] = zrow
        zcol = jnp.zeros((B, Hp, pad), jnp.float32)
        s_ref[:, :, 0:pad] = zcol
        s_ref[:, :, W + pad:Wp] = zcol
        s_ref[:, pad:H + pad, pad:W + pad] = b

        # Separable k x k window-OR of binary values:
        #   clip(sum over window, 0, 1) == max over window  (values are {0, 1}).
        # Row pass: max over k sublane offsets (keeps the column halo for pass 2).
        r = s_ref[:, 0:H, :]
        for dy in range(1, kernel_size):
            r = jnp.maximum(r, s_ref[:, dy:dy + H, :])
        # Column pass: max over k lane offsets.
        o = r[:, :, 0:W]
        for dx in range(1, kernel_size):
            o = jnp.maximum(o, r[:, :, dx:dx + W])

        if op_type == "erode":
            o = 1.0 - o
        o_ref[...] = o

    return kernel


def binary_morphology(x, kernel_size=KERNEL_SIZE, op_type="dilate"):
    """x: (N, C, H, W) array. Returns float32 (N, C, H, W) with values in {0, 1}."""
    assert op_type in ("dilate", "erode")
    assert kernel_size % 2 == 1, "module semantics assume odd kernel_size ('same' output)"
    N, C, H, W = x.shape
    pad = kernel_size // 2
    NC = N * C
    xf = x.reshape(NC, H, W)  # free (contiguous) reshape, native dtype

    # Pick the number of images per block: largest divisor of NC whose
    # (double-buffered in/out + scratch + temporaries) working set stays within a
    # conservative budget, so it fits every generation's default scoped VMEM
    # (v5e 16 MiB, v6e 32 MiB, v7x 32 MiB of 64 MiB physical) without needing
    # vmem_limit_bytes overrides.
    itemsize = jnp.dtype(x.dtype).itemsize
    per_img_bytes = (
        2 * H * W * itemsize                      # double-buffered input block
        + 2 * H * W * 4                           # double-buffered f32 output block
        + (H + 2 * pad) * (W + 2 * pad) * 4       # padded scratch
        + 2 * H * (W + 2 * pad) * 4               # in-kernel row-pass temporaries
    )
    budget_bytes = 6 * 1024 * 1024
    b_max = max(1, min(NC, budget_bytes // per_img_bytes))
    B = next(b for b in range(b_max, 0, -1) if NC % b == 0)

    kern = _make_morph_kernel(B, H, W, kernel_size, op_type)

    out = pl.pallas_call(
        kern,
        out_shape=jax.ShapeDtypeStruct((NC, H, W), jnp.float32),
        grid_spec=pltpu.PrefetchScalarGridSpec(
            num_scalar_prefetch=0,
            grid=(NC // B,),
            in_specs=[pl.BlockSpec((B, H, W), lambda i: (i, 0, 0))],
            out_specs=pl.BlockSpec((B, H, W), lambda i: (i, 0, 0)),
            scratch_shapes=[
                pltpu.VMEM((B, H + 2 * pad, W + 2 * pad), jnp.float32)
            ],
        ),
        compiler_params=pltpu.CompilerParams(
            dimension_semantics=("parallel",),
        ),
    )(xf)
    return out.reshape(N, C, H, W)


def _reference(x, kernel_size=KERNEL_SIZE, op_type="dilate"):
    """Plain-JAX reference mirroring torch.nn.functional.conv2d + clamp semantics."""
    pad = kernel_size // 2
    if op_type == "dilate":
        b = (x >= 0.5).astype(jnp.float32)
    else:
        b = (x < 0.5).astype(jnp.float32)
    N, C, H, W = b.shape
    bp = jnp.pad(b, ((0, 0), (0, 0), (pad, pad), (pad, pad)))
    acc = jnp.zeros((N, C, H, W), jnp.float32)
    for dy in range(kernel_size):
        for dx in range(kernel_size):
            acc = acc + bp[:, :, dy:dy + H, dx:dx + W]
    out = jnp.clip(acc, 0.0, 1.0)
    if op_type == "erode":
        out = 1.0 - out
    return out


if __name__ == "__main__":
    key = jax.random.PRNGKey(0)
    # conv2d weight is (1, 1, k, k) -> the module only accepts 1 input channel.
    x = jax.random.uniform(key, (2, 1, 16, 16), dtype=jnp.float32)

    ok = True
    for op in ("dilate", "erode"):
        y = binary_morphology(x, KERNEL_SIZE, op)
        y = jax.block_until_ready(y)
        y_ref = _reference(x, KERNEL_SIZE, op)
        if not jnp.allclose(y, y_ref, atol=1e-6):
            ok = False
            print(f"MISMATCH for op={op}")

    if ok:
        print("KERNEL_OK")
</pallas_src>

<mosaic_0001>
module attributes {stable_mosaic.version = 11 : i64} {
  func.func @kernel(%arg0: i32, %arg1: memref<2x16x16xf32, #tpu.memory_space<vmem>>, %arg2: memref<2x16x16xf32, #tpu.memory_space<vmem>>, %arg3: memref<2x20x20xf32, #tpu.memory_space<vmem>>) attributes {dimension_semantics = [#tpu.dimension_semantics<parallel>], iteration_bounds = array<i64: 1>, scalar_prefetch = 0 : i64, scratch_operands = 1 : i64, tpu.core_type = #tpu.core_type<tc>, window_params = [{transform_indices = @transform_0, window_bounds = array<i64: 2, 16, 16>}, {transform_indices = @transform_1, window_bounds = array<i64: 2, 16, 16>}]} {
    %c0 = arith.constant 0 : index
    %c0_0 = arith.constant 0 : index
    %c0_1 = arith.constant 0 : index
    %0 = vector.load %arg1[%c0, %c0_0, %c0_1] : memref<2x16x16xf32, #tpu.memory_space<vmem>>, vector<2x16x16xf32>
    %cst = arith.constant 5.000000e-01 : f32
    %1 = vector.broadcast %cst : f32 to vector<2x16x16xf32>
    %2 = arith.cmpf oge, %0, %1 : vector<2x16x16xf32>
    %3 = arith.extui %2 : vector<2x16x16xi1> to vector<2x16x16xi32>
    %4 = arith.sitofp %3 : vector<2x16x16xi32> to vector<2x16x16xf32>
    %cst_2 = arith.constant 0.000000e+00 : f32
    %5 = vector.broadcast %cst_2 : f32 to vector<2x2x20xf32>
    %c0_3 = arith.constant 0 : index
    %c0_4 = arith.constant 0 : index
    %c0_5 = arith.constant 0 : index
    %6 = vector.load %arg3[%c0_3, %c0_4, %c0_5] : memref<2x20x20xf32, #tpu.memory_space<vmem>>, vector<2x2x20xf32>
    tpu.vector_store %arg3[%c0_3, %c0_4, %c0_5], %5 {strides = array<i32>} : memref<2x20x20xf32, #tpu.memory_space<vmem>>, vector<2x2x20xf32>,
    %c0_6 = arith.constant 0 : index
    %c18 = arith.constant 18 : index
    %c0_7 = arith.constant 0 : index
    %7 = vector.load %arg3[%c0_6, %c18, %c0_7] : memref<2x20x20xf32, #tpu.memory_space<vmem>>, vector<2x2x20xf32>
    tpu.vector_store %arg3[%c0_6, %c18, %c0_7], %5 {strides = array<i32>} : memref<2x20x20xf32, #tpu.memory_space<vmem>>, vector<2x2x20xf32>,
    %cst_8 = arith.constant 0.000000e+00 : f32
    %8 = vector.broadcast %cst_8 : f32 to vector<2x20x2xf32>
    %c0_9 = arith.constant 0 : index
    %c0_10 = arith.constant 0 : index
    %c0_11 = arith.constant 0 : index
    %9 = vector.load %arg3[%c0_9, %c0_10, %c0_11] : memref<2x20x20xf32, #tpu.memory_space<vmem>>, vector<2x20x2xf32>
    tpu.vector_store %arg3[%c0_9, %c0_10, %c0_11], %8 {strides = array<i32>} : memref<2x20x20xf32, #tpu.memory_space<vmem>>, vector<2x20x2xf32>,
    %c0_12 = arith.constant 0 : index
    %c0_13 = arith.constant 0 : index
    %c18_14 = arith.constant 18 : index
    %10 = vector.load %arg3[%c0_12, %c0_13, %c18_14] : memref<2x20x20xf32, #tpu.memory_space<vmem>>, vector<2x20x2xf32>
    tpu.vector_store %arg3[%c0_12, %c0_13, %c18_14], %8 {strides = array<i32>} : memref<2x20x20xf32, #tpu.memory_space<vmem>>, vector<2x20x2xf32>,
    %c0_15 = arith.constant 0 : index
    %c2 = arith.constant 2 : index
    %c2_16 = arith.constant 2 : index
    %11 = vector.load %arg3[%c0_15, %c2, %c2_16] : memref<2x20x20xf32, #tpu.memory_space<vmem>>, vector<2x16x16xf32>
    tpu.vector_store %arg3[%c0_15, %c2, %c2_16], %4 {strides = array<i32>} : memref<2x20x20xf32, #tpu.memory_space<vmem>>, vector<2x16x16xf32>,
    %c0_17 = arith.constant 0 : index
    %c0_18 = arith.constant 0 : index
    %c0_19 = arith.constant 0 : index
    %12 = vector.load %arg3[%c0_17, %c0_18, %c0_19] : memref<2x20x20xf32, #tpu.memory_space<vmem>>, vector<2x16x20xf32>
    %c0_20 = arith.constant 0 : index
    %c1 = arith.constant 1 : index
    %c0_21 = arith.constant 0 : index
    %13 = vector.load %arg3[%c0_20, %c1, %c0_21] : memref<2x20x20xf32, #tpu.memory_space<vmem>>, vector<2x16x20xf32>
    %14 = arith.maximumf %12, %13 : vector<2x16x20xf32>
    %c0_22 = arith.constant 0 : index
    %c2_23 = arith.constant 2 : index
    %c0_24 = arith.constant 0 : index
    %15 = vector.load %arg3[%c0_22, %c2_23, %c0_24] : memref<2x20x20xf32, #tpu.memory_space<vmem>>, vector<2x16x20xf32>
    %16 = arith.maximumf %14, %15 : vector<2x16x20xf32>
    %c0_25 = arith.constant 0 : index
    %c3 = arith.constant 3 : index
    %c0_26 = arith.constant 0 : index
    %17 = vector.load %arg3[%c0_25, %c3, %c0_26] : memref<2x20x20xf32, #tpu.memory_space<vmem>>, vector<2x16x20xf32>
    %18 = arith.maximumf %16, %17 : vector<2x16x20xf32>
    %c0_27 = arith.constant 0 : index
    %c4 = arith.constant 4 : index
    %c0_28 = arith.constant 0 : index
    %19 = vector.load %arg3[%c0_27, %c4, %c0_28] : memref<2x20x20xf32, #tpu.memory_space<vmem>>, vector<2x16x20xf32>
    %20 = arith.maximumf %18, %19 : vector<2x16x20xf32>
    %21 = vector.extract_strided_slice %20 {offsets = [0, 0, 0], sizes = [2, 16, 16], strides = [1, 1, 1]} : vector<2x16x20xf32> to vector<2x16x16xf32>
    %22 = vector.extract_strided_slice %20 {offsets = [0, 0, 1], sizes = [2, 16, 16], strides = [1, 1, 1]} : vector<2x16x20xf32> to vector<2x16x16xf32>
    %23 = arith.maximumf %21, %22 : vector<2x16x16xf32>
    %24 = vector.extract_strided_slice %20 {offsets = [0, 0, 2], sizes = [2, 16, 16], strides = [1, 1, 1]} : vector<2x16x20xf32> to vector<2x16x16xf32>
    %25 = arith.maximumf %23, %24 : vector<2x16x16xf32>
    %26 = vector.extract_strided_slice %20 {offsets = [0, 0, 3], sizes = [2, 16, 16], strides = [1, 1, 1]} : vector<2x16x20xf32> to vector<2x16x16xf32>
    %27 = arith.maximumf %25, %26 : vector<2x16x16xf32>
    %28 = vector.extract_strided_slice %20 {offsets = [0, 0, 4], sizes = [2, 16, 16], strides = [1, 1, 1]} : vector<2x16x20xf32> to vector<2x16x16xf32>
    %29 = arith.maximumf %27, %28 : vector<2x16x16xf32>
    %c0_29 = arith.constant 0 : index
    %c0_30 = arith.constant 0 : index
    %c0_31 = arith.constant 0 : index
    %30 = vector.load %arg2[%c0_29, %c0_30, %c0_31] : memref<2x16x16xf32, #tpu.memory_space<vmem>>, vector<2x16x16xf32>
    tpu.vector_store %arg2[%c0_29, %c0_30, %c0_31], %29 {strides = array<i32>} : memref<2x16x16xf32, #tpu.memory_space<vmem>>, vector<2x16x16xf32>,
    return
  }
  func.func @transform_0(%arg0: i32) -> (i32, i32, i32) {
    %c0_i32 = arith.constant 0 : i32
    %c0_i32_0 = arith.constant 0 : i32
    %c0_i32_1 = arith.constant 0 : i32
    return %arg0, %c0_i32, %c0_i32_0 : i32, i32, i32
  }
  func.func @transform_1(%arg0: i32) -> (i32, i32, i32) {
    %c0_i32 = arith.constant 0 : i32
    %c0_i32_0 = arith.constant 0 : i32
    %c0_i32_1 = arith.constant 0 : i32
    return %arg0, %c0_i32, %c0_i32_0 : i32, i32, i32
  }
}

</mosaic_0001>

<llo_original>
// kernel: tpu_custom_call.1
$region0: #{tpu_custom_call.1}
  #allocation0 [shape = 'u32[]', space=smem, size = 0x4, offset = 0x4, fixed_abs, tag = 'smem constant byte address 0x4 - core index']
  #allocation1 [shape = 'u32[144,128]{1,0:T(1,128)}', space=vmem, size = 0x12000, scoped, tag = 'internal scratch']
  #allocation2 [shape = 'f32[2,20,20]{2,1,0:T(8,128)}', space=vmem, size = 0x6000, scoped, tag = 'scratch operand']
  %s0 = inlined_call_operand.hbm [shape: f32[2,16,16], index: 0, kind: input, shape index: {}]
  %s1 = inlined_call_operand.hbm [shape: f32[2,16,16], index: 1, kind: output, shape index: {}]
  %s2 = sld [smem:[#allocation0]]
  $region18: #{tpu_custom_call.1} parent=0
    _
  %s4 = ssub.s32 1, %s2
  %s5 = scalar_select 0, %s4, %s2
  $region1: #{tpu_custom_call.1} parent=0
    #allocation3 [shape = 'u8[16384]{0}', space=vmem, size = 0x4000, scoped, tag = 'input window, operand 0, single buffered']
    #allocation4 [shape = 's32[1]{0}', space=sflag, size = 0x4, scoped, tag = 'scoped memory for tpu_custom_call.1']
    #allocation5 [shape = 's32[1]{0}', space=sflag, size = 0x4, scoped, tag = 'scoped memory for tpu_custom_call.1']
    #allocation6 [shape = 'u8[16384]{0}', space=vmem, size = 0x4000, scoped, tag = 'output window, operand 0, single buffered']
    %6 = vsyncpa [#allocation4], 0
    %7 = vsyncpa [#allocation5], 0
    // Predicated region
    $region2: #{tpu_custom_call.1} parent=1 // pred_check
      _
    $region3: #{tpu_custom_call.1} parent=1 // pred_check_branch
      %9 = sbr.rel (0) target = $region5
    $region4: #{tpu_custom_call.1} parent=1 // pred_region
      %s11 = ssub.s32 512, 512
      %12 = vsyncadd [#allocation4], %s11
      %s13 = sshll.u32 [#allocation3], 4
      %s14 = int_to_ptr.vmem [resolvable:$true] %s13
      %19 = dma.hbm_to_vmem [thread:$0]  %s0, 512, %s14, [#allocation4], 128, 128, 8
    $region5: #{tpu_custom_call.1} parent=1 // pred_fallthru
      _
    // Predicated region
    $region6: #{tpu_custom_call.1} parent=1 // pred_check
      _
    $region7: #{tpu_custom_call.1} parent=1 // pred_check_branch
      %21 = sbr.rel (0) target = $region9
    $region8: #{tpu_custom_call.1} parent=1 // pred_region
      %22 = dma.done [#allocation4], 512
    $region9: #{tpu_custom_call.1} parent=1 // pred_fallthru
      _
    %v23 = vld [vmem:[#allocation3] sm:$0xff]
    %v24 = vld [vmem:[#allocation3 + $0x8] sm:$0xff]
    %v25 = vld [vmem:[#allocation3 + $0x10] sm:$0xff]
    %v26 = vld [vmem:[#allocation3 + $0x18] sm:$0xff]
    %vm27 = vcmp.ge.f32.partialorder %v23, 0.5
    %vm28 = vcmp.ge.f32.partialorder %v24, 0.5
    %vm29 = vcmp.ge.f32.partialorder %v25, 0.5
    %vm30 = vcmp.ge.f32.partialorder %v26, 0.5
    %v31 = vsel %vm27, 1, 0
    %v32 = vsel %vm28, 1, 0
    %v33 = vsel %vm29, 1, 0
    %v34 = vsel %vm30, 1, 0
    %v35 = vcvt.s32.f32 %v31
    %v36 = vcvt.s32.f32 %v32
    %v37 = vcvt.s32.f32 %v33
    %v38 = vcvt.s32.f32 %v34
    %vm39 = vcmask 156672
    %40 = vst.msk [vmem:[#allocation2] sm:$0x3] %vm39, 0.0
    %41 = vst.msk [vmem:[#allocation2 + $0x18] sm:$0x3] %vm39, 0.0
    %42 = vst.msk [vmem:[#allocation2 + $0x12] sm:$0x3] %vm39, 0.0
    %43 = vst.msk [vmem:[#allocation2 + $0x2a] sm:$0x3] %vm39, 0.0
    %vm44 = vcmask 15360
    %45 = vst.msk [vmem:[#allocation2] sm:$0xff] %vm44, 0.0
    %46 = vst.msk [vmem:[#allocation2 + $0x8] sm:$0xff] %vm44, 0.0
    %vm47 = vcmask 11264
    %48 = vst.msk [vmem:[#allocation2 + $0x10] sm:$0xf] %vm47, 0.0
    %49 = vst.msk [vmem:[#allocation2 + $0x18] sm:$0xff] %vm44, 0.0
    %50 = vst.msk [vmem:[#allocation2 + $0x20] sm:$0xff] %vm44, 0.0
    %51 = vst.msk [vmem:[#allocation2 + $0x28] sm:$0xf] %vm47, 0.0
    %vm52 = vcmask 162960
    %53 = vst.msk [vmem:[#allocation2] sm:$0xff] %vm52, 0.0
    %54 = vst.msk [vmem:[#allocation2 + $0x8] sm:$0xff] %vm52, 0.0
    %vm55 = vcmask 158864
    %56 = vst.msk [vmem:[#allocation2 + $0x10] sm:$0xf] %vm55, 0.0
    %57 = vst.msk [vmem:[#allocation2 + $0x18] sm:$0xff] %vm52, 0.0
    %58 = vst.msk [vmem:[#allocation2 + $0x20] sm:$0xff] %vm52, 0.0
    %59 = vst.msk [vmem:[#allocation2 + $0x28] sm:$0xf] %vm55, 0.0
    %64 = vrot.lane.b32.xlu0 %v35, 2
    %v65 = vpop.permute.xlu0 %64
    %66 = vrot.lane.b32.xlu0 %v36, 2
    %v67 = vpop.permute.xlu0 %66
    %68 = vrot.lane.b32.xlu0 %v37, 2
    %v69 = vpop.permute.xlu0 %68
    %70 = vrot.lane.b32.xlu0 %v38, 2
    %v71 = vpop.permute.xlu0 %70
    %vm76 = vcmask 146448
    %77 = vst.msk [vmem:[#allocation2 + $0x2] sm:$0xff] %vm76, %v65
    %78 = vst.msk [vmem:[#allocation2 + $0xa] sm:$0xff] %vm76, %v67
    %79 = vst.msk [vmem:[#allocation2 + $0x1a] sm:$0xff] %vm76, %v69
    %80 = vst.msk [vmem:[#allocation2 + $0x22] sm:$0xff] %vm76, %v71
    %v81 = vld [vmem:[#allocation2] sm:$0xff]
    %v82 = vld [vmem:[#allocation2 + $0x8] sm:$0xff]
    %v83 = vld [vmem:[#allocation2 + $0x18] sm:$0xff]
    %v84 = vld [vmem:[#allocation2 + $0x20] sm:$0xff]
    %v85 = vld [vmem:[#allocation2 + $0x1] sm:$0xff]
    %v86 = vld [vmem:[#allocation2 + $0x9] sm:$0xff]
    %v87 = vld [vmem:[#allocation2 + $0x19] sm:$0xff]
    %v88 = vld [vmem:[#allocation2 + $0x21] sm:$0xff]
    %v89 = vmax.f32 %v81, %v85
    %v90 = vmax.f32 %v82, %v86
    %v91 = vmax.f32 %v83, %v87
    %v92 = vmax.f32 %v84, %v88
    %v93 = vld [vmem:[#allocation2 + $0x2] sm:$0xff]
    %v94 = vld [vmem:[#allocation2 + $0xa] sm:$0xff]
    %v95 = vld [vmem:[#allocation2 + $0x1a] sm:$0xff]
    %v96 = vld [vmem:[#allocation2 + $0x22] sm:$0xff]
    %v97 = vmax.f32 %v89, %v93
    %v98 = vmax.f32 %v90, %v94
    %v99 = vmax.f32 %v91, %v95
    %v100 = vmax.f32 %v92, %v96
    %v101 = vld [vmem:[#allocation2 + $0x3] sm:$0xff]
    %v102 = vld [vmem:[#allocation2 + $0xb] sm:$0xff]
    %v103 = vld [vmem:[#allocation2 + $0x1b] sm:$0xff]
    %v104 = vld [vmem:[#allocation2 + $0x23] sm:$0xff]
    %v105 = vmax.f32 %v97, %v101
    %v106 = vmax.f32 %v98, %v102
    %v107 = vmax.f32 %v99, %v103
    %v108 = vmax.f32 %v100, %v104
    %v109 = vld [vmem:[#allocation2 + $0x4] sm:$0xff]
    %v110 = vld [vmem:[#allocation2 + $0xc] sm:$0xff]
    %v111 = vld [vmem:[#allocation2 + $0x1c] sm:$0xff]
    %v112 = vld [vmem:[#allocation2 + $0x24] sm:$0xff]
    %v113 = vmax.f32 %v105, %v109
    %v114 = vmax.f32 %v106, %v110
    %v115 = vmax.f32 %v107, %v111
    %v116 = vmax.f32 %v108, %v112
    %121 = vrot.lane.b32.xlu0 %v113, 127
    %v122 = vpop.permute.xlu0 %121
    %123 = vrot.lane.b32.xlu0 %v114, 127
    %v124 = vpop.permute.xlu0 %123
    %125 = vrot.lane.b32.xlu0 %v115, 127
    %v126 = vpop.permute.xlu0 %125
    %127 = vrot.lane.b32.xlu0 %v116, 127
    %v128 = vpop.permute.xlu0 %127
    %v133 = vmax.f32 %v113, %v122
    %v134 = vmax.f32 %v114, %v124
    %v135 = vmax.f32 %v115, %v126
    %v136 = vmax.f32 %v116, %v128
    %137 = vrot.lane.b32.xlu0 %v113, 126
    %v138 = vpop.permute.xlu0 %137
    %139 = vrot.lane.b32.xlu0 %v114, 126
    %v140 = vpop.permute.xlu0 %139
    %141 = vrot.lane.b32.xlu0 %v115, 126
    %v142 = vpop.permute.xlu0 %141
    %143 = vrot.lane.b32.xlu0 %v116, 126
    %v144 = vpop.permute.xlu0 %143
    %v149 = vmax.f32 %v133, %v138
    %v150 = vmax.f32 %v134, %v140
    %v151 = vmax.f32 %v135, %v142
    %v152 = vmax.f32 %v136, %v144
    %153 = vrot.lane.b32.xlu0 %v113, 125
    %v154 = vpop.permute.xlu0 %153
    %155 = vrot.lane.b32.xlu0 %v114, 125
    %v156 = vpop.permute.xlu0 %155
    %157 = vrot.lane.b32.xlu0 %v115, 125
    %v158 = vpop.permute.xlu0 %157
    %159 = vrot.lane.b32.xlu0 %v116, 125
    %v160 = vpop.permute.xlu0 %159
    %v165 = vmax.f32 %v149, %v154
    %v166 = vmax.f32 %v150, %v156
    %v167 = vmax.f32 %v151, %v158
    %v168 = vmax.f32 %v152, %v160
    %169 = vrot.lane.b32.xlu0 %v113, 124
    %v170 = vpop.permute.xlu0 %169
    %171 = vrot.lane.b32.xlu0 %v114, 124
    %v172 = vpop.permute.xlu0 %171
    %173 = vrot.lane.b32.xlu0 %v115, 124
    %v174 = vpop.permute.xlu0 %173
    %175 = vrot.lane.b32.xlu0 %v116, 124
    %v176 = vpop.permute.xlu0 %175
    %v181 = vmax.f32 %v165, %v170
    %v182 = vmax.f32 %v166, %v172
    %v183 = vmax.f32 %v167, %v174
    %v184 = vmax.f32 %v168, %v176
    %vm185 = vcmask 130048
    %186 = vst.msk [vmem:[#allocation6] sm:$0xff] %vm185, %v181
    %187 = vst.msk [vmem:[#allocation6 + $0x8] sm:$0xff] %vm185, %v182
    %188 = vst.msk [vmem:[#allocation6 + $0x10] sm:$0xff] %vm185, %v183
    %189 = vst.msk [vmem:[#allocation6 + $0x18] sm:$0xff] %vm185, %v184
    // Predicated region
    $region10: #{tpu_custom_call.1} parent=1 // pred_check
      _
    $region11: #{tpu_custom_call.1} parent=1 // pred_check_branch
      %191 = sbr.rel (0) target = $region13
    $region12: #{tpu_custom_call.1} parent=1 // pred_region
      %s193 = ssub.s32 512, 512
      %194 = vsyncadd [#allocation5], %s193
      %s195 = sshll.u32 [#allocation6], 4
      %s196 = int_to_ptr.vmem [resolvable:$true] %s195
      %201 = dma.vmem_to_hbm [thread:$0]  %s196, 512, %s1, [#allocation5], 128, 128, 8
    $region13: #{tpu_custom_call.1} parent=1 // pred_fallthru
      _
    // Predicated region
    $region14: #{tpu_custom_call.1} parent=1 // pred_check
      _
    $region15: #{tpu_custom_call.1} parent=1 // pred_check_branch
      %203 = sbr.rel (0) target = $region17
    $region16: #{tpu_custom_call.1} parent=1 // pred_region
      %204 = dma.done [#allocation5], 512
    $region17: #{tpu_custom_call.1} parent=1 // pred_fallthru
      _
    %205 = vsyncpa [#allocation4], 1
    %206 = vsyncpa [#allocation5], 1

</llo_original>
